<compile_context>
chip_gen: v5e
topology: v5e:2x2
jax: 0.10.0
libtpu: 0.0.40
codegen_flags: <defaults>
</compile_context>

<pallas_src>
import jax
import jax.numpy as jnp
from jax.experimental import pallas as pl
from jax.experimental.pallas import tpu as pltpu

NUM_GEO = 19                      # ClustGeoEdgeEncoder.feature_size
NUM_CNN = 32                      # ClustCNNEdgeEncoder.feature_size
FEATURE_SIZE = NUM_GEO + NUM_CNN  # 51

_MAX_TM = 8192                    # rows per grid step (bf16 in / f32 out, ~5 MiB dbl-buffered)


# ----------------------------------------------------------------------------
# Pallas kernel: fused concat + activation (ReLU) + Linear(F, F)
#   o = ReLU(g) @ W_geo + ReLU(c) @ W_cnn + b   (bf16 MXU operands, f32 accumulate)
# ----------------------------------------------------------------------------
def _fused_mix_head_kernel(geo_ref, cnn_ref, wg_ref, wc_ref, b_ref, o_ref):
    # Inputs are already bf16; ReLU stays in bf16 (no extra f32 round-trips,
    # friendly to v5e's f32-only VALU since the widen/narrow hides under DMA).
    g = jnp.maximum(geo_ref[...], 0).astype(jnp.bfloat16)
    c = jnp.maximum(cnn_ref[...], 0).astype(jnp.bfloat16)
    acc = jnp.dot(g, wg_ref[...], preferred_element_type=jnp.float32)
    acc = acc + jnp.dot(c, wc_ref[...], preferred_element_type=jnp.float32)
    o_ref[...] = acc + b_ref[...]


def _row_tile(E):
    """Pick the row tile: >=~4 grid steps when possible (v7x megacore + pipeline
    depth), multiple of 8 (sublane), capped at _MAX_TM, full-extent if tiny."""
    if E < 8:
        return E                          # full-extent block is always legal
    tm = max(8, ((pl.cdiv(E, 4) + 7) // 8) * 8)
    return min(tm, _MAX_TM)


def mixed_edge_head(features_geo, features_cnn, w_geo, w_cnn, bias_row):
    """Fused concat + activation + linear head of the mixed edge encoder.

    features_geo : (E, 19) bfloat16
    features_cnn : (E, 32) bfloat16
    w_geo        : (19, 51) bfloat16  -- top rows of W^T (in, out) layout
    w_cnn        : (32, 51) bfloat16  -- bottom rows of W^T
    bias_row     : (1, 51)  float32
    returns      : (E, 51)  float32  == ReLU([geo, cnn]) @ W^T + b
    """
    E = features_geo.shape[0]
    F = FEATURE_SIZE
    tm = _row_tile(E)
    grid = (pl.cdiv(E, tm),)

    bytes_accessed = (E * NUM_GEO * 2 + E * NUM_CNN * 2      # bf16 activations in
                      + E * F * 4                            # f32 output
                      + F * F * 2 + F * 4)                   # weight + bias (once)

    return pl.pallas_call(
        _fused_mix_head_kernel,
        out_shape=jax.ShapeDtypeStruct((E, F), jnp.float32),
        grid_spec=pltpu.PrefetchScalarGridSpec(
            num_scalar_prefetch=0,
            grid=grid,
            in_specs=[
                # Activation streams: last dim equals full array dim -> legal.
                pl.BlockSpec((tm, NUM_GEO), lambda i: (i, 0)),
                pl.BlockSpec((tm, NUM_CNN), lambda i: (i, 0)),
                # Weight halves / bias: constant index_map -> resident across row tiles.
                pl.BlockSpec((NUM_GEO, F), lambda i: (0, 0)),
                pl.BlockSpec((NUM_CNN, F), lambda i: (0, 0)),
                pl.BlockSpec((1, F), lambda i: (0, 0)),
            ],
            out_specs=pl.BlockSpec((tm, F), lambda i: (i, 0)),
        ),
        compiler_params=pltpu.CompilerParams(
            dimension_semantics=("parallel",)),   # rows shard across v7x TensorCores
        cost_estimate=pl.CostEstimate(
            flops=2 * E * F * F,
            transcendentals=0,
            bytes_accessed=bytes_accessed),
    )(features_geo, features_cnn, w_geo, w_cnn, bias_row)


def prepare_linear_params(weight, bias):
    """One-time parameter prep (hoisted out of the per-call hot path).

    weight : (F, F) float32 torch-style (out_features, in_features)
    bias   : (F,)   float32
    Returns the transposed weight split at the geo/cnn boundary so the concat
    never needs to be materialized.
    """
    w_t = jnp.asarray(weight, jnp.float32).T.astype(jnp.bfloat16)   # (in, out)
    w_geo = w_t[:NUM_GEO, :]                                        # (19, 51)
    w_cnn = w_t[NUM_GEO:, :]                                        # (32, 51)
    bias_row = jnp.asarray(bias, jnp.float32).reshape(1, -1)        # (1, 51)
    return w_geo, w_cnn, bias_row


# ----------------------------------------------------------------------------
# Cluster packing: ragged clusters -> padded (C, Pmax) index + mask arrays
# (done once at setup, Python loop is outside the jitted forward)
# ----------------------------------------------------------------------------
def pack_clusters(clusts):
    C = len(clusts)
    pmax = max(int(c.shape[0]) for c in clusts)
    idx = jnp.zeros((C, pmax), jnp.int32)
    mask = jnp.zeros((C, pmax), bool)
    for c, ci in enumerate(clusts):
        n = int(ci.shape[0])
        idx = idx.at[c, :n].set(ci.astype(jnp.int32))
        mask = mask.at[c, :n].set(True)
    return idx, mask


# ----------------------------------------------------------------------------
# Geometric edge encoder (glue, plain JAX, vmapped): classic 19-D features
#   [closest point in c1 (3), closest point in c2 (3), unit displacement (3),
#    separation length (1), outer(disp, disp) flattened (9)]
# NOTE: if an edge references a fully-masked (empty) cluster, argmin falls back
# to padded point 0; callers must not build edges over empty clusters.
# ----------------------------------------------------------------------------
def geo_edge_features(coords, clust_idx, clust_mask, edges):
    pmax = clust_idx.shape[1]

    def one_edge(e):
        i, j = e[0], e[1]
        xi = coords[clust_idx[i]]                         # (P, 3)
        xj = coords[clust_idx[j]]                         # (P, 3)
        mi = clust_mask[i]
        mj = clust_mask[j]
        d2 = jnp.sum((xi[:, None, :] - xj[None, :, :]) ** 2, axis=-1)
        d2 = jnp.where(mi[:, None] & mj[None, :], d2, jnp.inf)
        flat = jnp.argmin(d2)
        a = flat // pmax
        b = flat % pmax
        v1 = xi[a]
        v2 = xj[b]
        disp = v1 - v2
        lend = jnp.linalg.norm(disp)
        disp = jnp.where(lend > 0, disp / jnp.where(lend > 0, lend, 1.0), disp)
        B = jnp.outer(disp, disp).reshape(-1)
        return jnp.concatenate([v1, v2, disp, lend[None], B])

    # bf16 at the boundary: ReLU commutes with bf16 rounding, halves HBM bytes.
    return jax.vmap(one_edge)(edges).astype(jnp.bfloat16)            # (E, 19)


# ----------------------------------------------------------------------------
# CNN edge encoder stand-in (glue, plain JAX, batched over all edges)
# TODO(synk): the real ClustCNNEdgeEncoder runs a 3D *sparse* ResNet over the
# merged voxels of each edge's two clusters; sparse convolution has no clean
# Pallas equivalent at this scope, so a deterministic point-MLP + masked
# mean-pool stand-in keeps the (E, NUM_CNN) output contract.
# ----------------------------------------------------------------------------
def init_cnn_params(key):
    k1, k2 = jax.random.split(key)
    w1 = jax.random.normal(k1, (5, 64), jnp.float32) * 0.1   # [x,y,z,val,tag] -> 64
    w2 = jax.random.normal(k2, (64, NUM_CNN), jnp.float32) * 0.1
    return dict(w1=w1, w2=w2)


def cnn_edge_features(data, clust_idx, clust_mask, edges, params):
    coords = data[:, 1:4]
    vals = data[:, 4:5]
    pmax = clust_idx.shape[1]
    E = edges.shape[0]

    # Gather all edges' point sets into one (E, 2P, 5) slab and run a SINGLE
    # (E*2P, 5) @ (5, 64) @ (64, 32) matmul chain instead of per-edge tiny-K
    # matmuls (the real hot spot for large E*P per the perf review).
    def gather(cid, tag):
        idx = clust_idx[cid]                                          # (E, P)
        pts = jnp.concatenate(
            [coords[idx], vals[idx],
             jnp.full((E, pmax, 1), tag, jnp.float32)], axis=-1)      # (E, P, 5)
        return pts, clust_mask[cid]                                   # mask (E, P)

    pi, mi = gather(edges[:, 0], 0.0)
    pj, mj = gather(edges[:, 1], 1.0)
    pts = jnp.concatenate([pi, pj], axis=1)                           # (E, 2P, 5)
    m = jnp.concatenate([mi, mj], axis=1)                             # (E, 2P)

    flat = pts.reshape(E * 2 * pmax, 5)
    h = jnp.tanh(flat @ params["w1"]) @ params["w2"]                  # (E*2P, 32)
    h = h.reshape(E, 2 * pmax, NUM_CNN)
    h = jnp.where(m[:, :, None], h, 0.0)
    denom = jnp.maximum(jnp.sum(m, axis=1), 1).astype(jnp.float32)    # (E,)
    pooled = jnp.sum(h, axis=1) / denom[:, None]                      # (E, 32)
    return pooled.astype(jnp.bfloat16)


# ----------------------------------------------------------------------------
# Full mixed encoder forward (mirrors ClustGeoCNNMixEdgeEncoder.forward), jitted
# ----------------------------------------------------------------------------
@jax.jit
def clust_geo_cnn_mix_edge_encoder(data, clust_idx, clust_mask, edges,
                                   cnn_params, w_geo, w_cnn, bias_row):
    features_geo = geo_edge_features(data[:, 1:4], clust_idx, clust_mask, edges)
    features_cnn = cnn_edge_features(data, clust_idx, clust_mask, edges, cnn_params)
    # concat + activation + linear all fused inside the Pallas kernel
    return mixed_edge_head(features_geo, features_cnn, w_geo, w_cnn, bias_row)


if __name__ == "__main__":
    key = jax.random.PRNGKey(0)
    k_coord, k_val, k_cnn, k_w, k_b = jax.random.split(key, 5)

    # data: (N, 1 + D + N_f) sparse-tensor batch -> columns [batch_id, x, y, z, value]
    N, D = 64, 3
    coords = jax.random.uniform(k_coord, (N, D), dtype=jnp.float32) * 16.0
    values = jax.random.uniform(k_val, (N, 1), dtype=jnp.float32)
    batch_col = jnp.zeros((N, 1), jnp.float32)
    data = jnp.concatenate([batch_col, coords, values], axis=1)            # (64, 5)

    # clusts: 4 clusters of 16 points each; edge_index: 6 undirected cluster pairs
    num_clusts, pts_per = 4, N // 4
    clusts = [jnp.arange(c * pts_per, (c + 1) * pts_per) for c in range(num_clusts)]
    clust_idx, clust_mask = pack_clusters(clusts)
    edge_index = jnp.array(
        [(0, 1), (0, 2), (0, 3), (1, 2), (1, 3), (2, 3)], dtype=jnp.int32)  # (6, 2)

    # deterministic parameters; Linear weight transposed + split ONCE at init
    cnn_params = init_cnn_params(k_cnn)
    lin_w = jax.random.normal(k_w, (FEATURE_SIZE, FEATURE_SIZE), jnp.float32) * 0.1
    lin_b = jax.random.normal(k_b, (FEATURE_SIZE,), jnp.float32) * 0.1
    w_geo, w_cnn, bias_row = prepare_linear_params(lin_w, lin_b)

    result = clust_geo_cnn_mix_edge_encoder(
        data, clust_idx, clust_mask, edge_index, cnn_params, w_geo, w_cnn, bias_row)
    jax.block_until_ready(result)

    assert result.shape == (edge_index.shape[0], FEATURE_SIZE)
    assert result.dtype == jnp.float32
    assert bool(jnp.all(jnp.isfinite(result)))

    # Cross-check the fused head against a plain-JAX reference (bf16 operands).
    g32 = geo_edge_features(data[:, 1:4], clust_idx, clust_mask, edge_index).astype(jnp.float32)
    c32 = cnn_edge_features(data, clust_idx, clust_mask, edge_index, cnn_params).astype(jnp.float32)
    mix = jnp.concatenate([g32, c32], axis=1)
    ref = jnp.maximum(mix, 0.0).astype(jnp.bfloat16).astype(jnp.float32) @ \
          jnp.concatenate([w_geo, w_cnn], axis=0).astype(jnp.float32) + bias_row
    assert bool(jnp.allclose(result, ref, atol=2e-2, rtol=2e-2))

    print("KERNEL_OK")
</pallas_src>

<mosaic_0001>
module attributes {stable_mosaic.version = 11 : i64} {
  func.func @_fused_mix_head_kernel(%arg0: i32, %arg1: memref<6x19xbf16, #tpu.memory_space<vmem>>, %arg2: memref<6x32xbf16, #tpu.memory_space<vmem>>, %arg3: memref<19x51xbf16, #tpu.memory_space<vmem>>, %arg4: memref<32x51xbf16, #tpu.memory_space<vmem>>, %arg5: memref<1x51xf32, #tpu.memory_space<vmem>>, %arg6: memref<6x51xf32, #tpu.memory_space<vmem>>) attributes {dimension_semantics = [#tpu.dimension_semantics<parallel>], iteration_bounds = array<i64: 1>, scalar_prefetch = 0 : i64, scratch_operands = 0 : i64, tpu.core_type = #tpu.core_type<tc>, window_params = [{transform_indices = @transform_0, window_bounds = array<i64: 6, 19>}, {transform_indices = @transform_1, window_bounds = array<i64: 6, 32>}, {pipeline_mode = #tpu.pipeline_mode<synchronous>, transform_indices = @transform_2, window_bounds = array<i64: 19, 51>}, {pipeline_mode = #tpu.pipeline_mode<synchronous>, transform_indices = @transform_3, window_bounds = array<i64: 32, 51>}, {pipeline_mode = #tpu.pipeline_mode<synchronous>, transform_indices = @transform_4, window_bounds = array<i64: 1, 51>}, {transform_indices = @transform_5, window_bounds = array<i64: 6, 51>}]} {
    %c0 = arith.constant 0 : index
    %c0_0 = arith.constant 0 : index
    %0 = vector.load %arg1[%c0, %c0_0] : memref<6x19xbf16, #tpu.memory_space<vmem>>, vector<6x19xbf16>
    %cst = arith.constant 0.000000e+00 : bf16
    %1 = vector.broadcast %cst : bf16 to vector<6x19xbf16>
    %2 = arith.maximumf %0, %1 : vector<6x19xbf16>
    %c0_1 = arith.constant 0 : index
    %c0_2 = arith.constant 0 : index
    %3 = vector.load %arg2[%c0_1, %c0_2] : memref<6x32xbf16, #tpu.memory_space<vmem>>, vector<6x32xbf16>
    %cst_3 = arith.constant 0.000000e+00 : bf16
    %4 = vector.broadcast %cst_3 : bf16 to vector<6x32xbf16>
    %5 = arith.maximumf %3, %4 : vector<6x32xbf16>
    %c0_4 = arith.constant 0 : index
    %c0_5 = arith.constant 0 : index
    %6 = vector.load %arg3[%c0_4, %c0_5] : memref<19x51xbf16, #tpu.memory_space<vmem>>, vector<19x51xbf16>
    %cst_6 = arith.constant dense<0.000000e+00> : vector<6x51xf32>
    %7 = tpu.matmul %2, %6, %cst_6 {dimension_numbers = #tpu.dot_dimension_numbers<[1], [0], [0], [1], [0, 0, 1, 1], [], []>} : vector<6x19xbf16>, vector<19x51xbf16>, vector<6x51xf32> -> vector<6x51xf32>
    %c0_7 = arith.constant 0 : index
    %c0_8 = arith.constant 0 : index
    %8 = vector.load %arg4[%c0_7, %c0_8] : memref<32x51xbf16, #tpu.memory_space<vmem>>, vector<32x51xbf16>
    %cst_9 = arith.constant dense<0.000000e+00> : vector<6x51xf32>
    %9 = tpu.matmul %5, %8, %cst_9 {dimension_numbers = #tpu.dot_dimension_numbers<[1], [0], [0], [1], [0, 0, 1, 1], [], []>} : vector<6x32xbf16>, vector<32x51xbf16>, vector<6x51xf32> -> vector<6x51xf32>
    %10 = arith.addf %7, %9 : vector<6x51xf32>
    %c0_10 = arith.constant 0 : index
    %c0_11 = arith.constant 0 : index
    %11 = vector.load %arg5[%c0_10, %c0_11] : memref<1x51xf32, #tpu.memory_space<vmem>>, vector<1x51xf32>
    %12 = vector.broadcast %11 : vector<1x51xf32> to vector<6x51xf32>
    %13 = arith.addf %10, %12 : vector<6x51xf32>
    %c0_12 = arith.constant 0 : index
    %c0_13 = arith.constant 0 : index
    %14 = vector.load %arg6[%c0_12, %c0_13] : memref<6x51xf32, #tpu.memory_space<vmem>>, vector<6x51xf32>
    tpu.vector_store %arg6[%c0_12, %c0_13], %13 {strides = array<i32>} : memref<6x51xf32, #tpu.memory_space<vmem>>, vector<6x51xf32>,
    return
  }
  func.func @transform_0(%arg0: i32) -> (i32, i32) {
    %c0_i32 = arith.constant 0 : i32
    %c0_i32_0 = arith.constant 0 : i32
    return %arg0, %c0_i32 : i32, i32
  }
  func.func @transform_1(%arg0: i32) -> (i32, i32) {
    %c0_i32 = arith.constant 0 : i32
    %c0_i32_0 = arith.constant 0 : i32
    return %arg0, %c0_i32 : i32, i32
  }
  func.func @transform_2(%arg0: i32) -> (i32, i32) {
    %c0_i32 = arith.constant 0 : i32
    %c0_i32_0 = arith.constant 0 : i32
    %c0_i32_1 = arith.constant 0 : i32
    return %c0_i32, %c0_i32_0 : i32, i32
  }
  func.func @transform_3(%arg0: i32) -> (i32, i32) {
    %c0_i32 = arith.constant 0 : i32
    %c0_i32_0 = arith.constant 0 : i32
    %c0_i32_1 = arith.constant 0 : i32
    return %c0_i32, %c0_i32_0 : i32, i32
  }
  func.func @transform_4(%arg0: i32) -> (i32, i32) {
    %c0_i32 = arith.constant 0 : i32
    %c0_i32_0 = arith.constant 0 : i32
    %c0_i32_1 = arith.constant 0 : i32
    return %c0_i32, %c0_i32_0 : i32, i32
  }
  func.func @transform_5(%arg0: i32) -> (i32, i32) {
    %c0_i32 = arith.constant 0 : i32
    %c0_i32_0 = arith.constant 0 : i32
    return %arg0, %c0_i32 : i32, i32
  }
}

</mosaic_0001>

<llo_original>
// kernel: clust_geo_cnn_mix_edge_encoder.1
$region0: #{clust_geo_cnn_mix_edge_encoder.1}
  #allocation0 [shape = 'u32[]', space=smem, size = 0x4, offset = 0x4, fixed_abs, tag = 'smem constant byte address 0x4 - core index']
  #allocation1 [shape = 'u32[72,128]{1,0:T(1,128)}', space=vmem, size = 0x9000, scoped, tag = 'internal scratch']
  %s0 = inlined_call_operand.vmem [shape: bf16[6,19], index: 0, kind: input, shape index: {}]
  %s1 = inlined_call_operand.vmem [shape: bf16[6,32], index: 1, kind: input, shape index: {}]
  %s2 = inlined_call_operand.vmem [shape: bf16[19,51], index: 2, kind: input, shape index: {}]
  %s3 = inlined_call_operand.vmem [shape: bf16[32,51], index: 3, kind: input, shape index: {}]
  %s4 = inlined_call_operand.vmem [shape: f32[1,51], index: 4, kind: input, shape index: {}]
  %s5 = inlined_call_operand.hbm [shape: f32[6,51], index: 5, kind: output, shape index: {}]
  %s6 = sld [smem:[#allocation0]]
  $region30: #{clust_geo_cnn_mix_edge_encoder.1} parent=0
    _
  %s8 = ssub.s32 1, %s6
  %s9 = scalar_select 0, %s8, %s6
  $region1: #{clust_geo_cnn_mix_edge_encoder.1} parent=0
    #allocation2 [shape = 'u8[4096]{0}', space=vmem, size = 0x1000, scoped, tag = 'output window, operand 0, single buffered']
    #allocation3 [shape = 's32[1]{0}', space=sflag, size = 0x4, scoped, tag = 'scoped memory for clust_geo_cnn_mix_edge_encoder.1']
    %10 = vsyncpa [#allocation3], 0
    // Predicated region
    $region2: #{clust_geo_cnn_mix_edge_encoder.1} parent=1 // pred_check
      _
    $region3: #{clust_geo_cnn_mix_edge_encoder.1} parent=1 // pred_check_branch
      %12 = sbr.rel (0) target = $region5
    $region4: #{clust_geo_cnn_mix_edge_encoder.1} parent=1 // pred_region
      _
    $region5: #{clust_geo_cnn_mix_edge_encoder.1} parent=1 // pred_fallthru
      _
    // Predicated region
    $region6: #{clust_geo_cnn_mix_edge_encoder.1} parent=1 // pred_check
      _
    $region7: #{clust_geo_cnn_mix_edge_encoder.1} parent=1 // pred_check_branch
      %14 = sbr.rel (0) target = $region9
    $region8: #{clust_geo_cnn_mix_edge_encoder.1} parent=1 // pred_region
      _
    $region9: #{clust_geo_cnn_mix_edge_encoder.1} parent=1 // pred_fallthru
      _
    // Predicated region
    $region10: #{clust_geo_cnn_mix_edge_encoder.1} parent=1 // pred_check
      _
    $region11: #{clust_geo_cnn_mix_edge_encoder.1} parent=1 // pred_check_branch
      %16 = sbr.rel (0) target = $region13
    $region12: #{clust_geo_cnn_mix_edge_encoder.1} parent=1 // pred_region
      _
    $region13: #{clust_geo_cnn_mix_edge_encoder.1} parent=1 // pred_fallthru
      _
    // Predicated region
    $region14: #{clust_geo_cnn_mix_edge_encoder.1} parent=1 // pred_check
      _
    $region15: #{clust_geo_cnn_mix_edge_encoder.1} parent=1 // pred_check_branch
      %18 = sbr.rel (0) target = $region17
    $region16: #{clust_geo_cnn_mix_edge_encoder.1} parent=1 // pred_region
      _
    $region17: #{clust_geo_cnn_mix_edge_encoder.1} parent=1 // pred_fallthru
      _
    // Predicated region
    $region18: #{clust_geo_cnn_mix_edge_encoder.1} parent=1 // pred_check
      _
    $region19: #{clust_geo_cnn_mix_edge_encoder.1} parent=1 // pred_check_branch
      %20 = sbr.rel (0) target = $region21
    $region20: #{clust_geo_cnn_mix_edge_encoder.1} parent=1 // pred_region
      _
    $region21: #{clust_geo_cnn_mix_edge_encoder.1} parent=1 // pred_fallthru
      _
    %v22 = vld [vmem:[%s0] sm:$0x7]
    %v23 = vunpack.c.l.bf16 %v22
    %v24 = vmax.f32 %v23, 0.0
    %v25 = vpack.c.bf16 %v24, %v24
    %v26 = vld [vmem:[%s1] sm:$0x7]
    %v27 = vunpack.c.l.bf16 %v26
    %v28 = vmax.f32 %v27, 0.0
    %v29 = vpack.c.bf16 %v28, %v28
    %v30 = vld [vmem:[%s2] sm:$0xf]
    %v31 = vld [vmem:[%s2 + $0x4] sm:$0xf]
    %v32 = vld [vmem:[%s2 + $0x8] sm:$0x3]
    %v33 = vld [vmem:[%s3] sm:$0xf]
    %v34 = vld [vmem:[%s3 + $0x4] sm:$0xf]
    %v35 = vld [vmem:[%s3 + $0x8] sm:$0xf]
    %v36 = vld [vmem:[%s3 + $0xc] sm:$0xf]
    %v41 = vunpack.c.l.b16 %v33
    %v42 = vunpack.c.l.b16 %v34
    %v43 = vunpack.c.l.b16 %v35
    %v44 = vunpack.c.l.b16 %v36
    %v45 = vpack.c.b16 %v42, %v41
    %v46 = vpack.c.b16 %v44, %v43
    %vm49 = vcmask 261120
    %v51 = vsel %vm49, %v29, 0
    %53 = vmatpush.bf16.msra.mxu0 0
    %54 = vmatpush.bf16.msra.mxu0 0
    %55 = vmatpush.bf16.msra.mxu0 0
    %56 = vmatpush.bf16.msra.mxu0 0
    %57 = vmatpush.bf16.msra.mxu0 0
    %58 = vmatpush.bf16.msra.mxu0 0
    %59 = vmatpush.bf16.msra.mxu0 %v46
    %60 = vmatpush.bf16.msra.mxu0 %v45
    %61 = vmatmul.bf16.gmra.mxu0 %v51
    %v62 = vpop.f32.mrf.mxu0
    %v63 = vadd.f32 0.0, %v62
    %v64 = vpop.f32.mrf.mxu0
    %65 = vdwg.mxu0
    %v69 = vunpack.c.l.b16 %v30
    %v70 = vunpack.c.l.b16 %v31
    %v71 = vunpack.c.l.b16 %v32
    %v72 = vpack.c.b16 %v70, %v69
    %v73 = vpack.c.b16 %v71, %v71
    %vm75 = vcmask 154624
    %v77 = vsel %vm75, %v25, 0
    %vm79 = vcmask 1040384
    %vm80 = vcmask 1041408
    %v81 = vsel %vm79, 4294967295, 65535
    %v82 = vsel %vm80, %v81, 0
    %v84 = vand.u32 %v73, %v82
    %86 = vmatpush.bf16.msra.mxu0 0
    %87 = vmatpush.bf16.msra.mxu0 0
    %88 = vmatpush.bf16.msra.mxu0 0
    %89 = vmatpush.bf16.msra.mxu0 0
    %90 = vmatpush.bf16.msra.mxu0 0
    %91 = vmatpush.bf16.msra.mxu0 0
    %92 = vmatpush.bf16.msra.mxu0 %v84
    %93 = vmatpush.bf16.msra.mxu0 %v72
    %94 = vmatmul.bf16.gmra.mxu0 %v77
    %v95 = vpop.f32.mrf.mxu0
    %v96 = vadd.f32 %v63, %v95
    %v97 = vpop.f32.mrf.mxu0
    %98 = vdwg.mxu0
    %v99 = vld [vmem:[%s4] sm:$0x1]
    %v101 = vperm.slane %v99, 0
    %v103 = vadd.f32 %v96, %v101
    %vm104 = vcmask 414720
    %105 = vst.msk [vmem:[#allocation2] sm:$0x3f] %vm104, %v103
    // Predicated region
    $region22: #{clust_geo_cnn_mix_edge_encoder.1} parent=1 // pred_check
      _
    $region23: #{clust_geo_cnn_mix_edge_encoder.1} parent=1 // pred_check_branch
      %107 = sbr.rel (0) target = $region25
    $region24: #{clust_geo_cnn_mix_edge_encoder.1} parent=1 // pred_region
      %109 = vsyncadd [#allocation3], 0
      %s111 = sshll.u32 [#allocation2], 4
      %s112 = int_to_ptr.vmem [resolvable:$true] %s111
      %s113 = sshll.u32 %s5, 4
      %s114 = int_to_ptr.hbm [resolvable:$true] %s113
      %116 = dma.vmem_to_hbm [thread:$0]  %s112, 128, %s114, [#allocation3]
    $region25: #{clust_geo_cnn_mix_edge_encoder.1} parent=1 // pred_fallthru
      _
    // Predicated region
    $region26: #{clust_geo_cnn_mix_edge_encoder.1} parent=1 // pred_check
      _
    $region27: #{clust_geo_cnn_mix_edge_encoder.1} parent=1 // pred_check_branch
      %118 = sbr.rel (0) target = $region29
    $region28: #{clust_geo_cnn_mix_edge_encoder.1} parent=1 // pred_region
      %120 = dma.done [#allocation3], 128
    $region29: #{clust_geo_cnn_mix_edge_encoder.1} parent=1 // pred_fallthru
      _
    %121 = vsyncpa [#allocation3], 1

</llo_original>
